<compile_context>
chip_gen: v6e
topology: v6e:2x2x1
jax: 0.10.0
libtpu: 0.0.40
codegen_flags: <defaults>
</compile_context>

<pallas_src>
import functools

import jax
import jax.numpy as jnp
from jax.experimental import pallas as pl
from jax.experimental.pallas import tpu as pltpu

LANE = 128     # vreg lane width (last dim)
SUBLANE = 8    # vreg sublane width (second-to-last dim)


def _round_up(n: int, m: int) -> int:
    return ((n + m - 1) // m) * m


def mlp_kernel(x_ref, w1_ref, b1_ref, w2_ref, b2_ref, w3_ref, b3_ref, o_ref):
    # In-kernel bf16 cast of the activation tile (VPU) — avoids a wrapper HBM pass.
    x = x_ref[...].astype(jnp.bfloat16)
    # Layer 1: x @ W1 + b1, ReLU   (bf16 MXU feed, f32 accumulate)
    h1 = jnp.dot(x, w1_ref[...], preferred_element_type=jnp.float32)
    h1 = jnp.maximum(h1 + b1_ref[...], 0.0).astype(jnp.bfloat16)
    # Layer 2: h1 @ W2 + b2, ReLU
    h2 = jnp.dot(h1, w2_ref[...], preferred_element_type=jnp.float32)
    h2 = jnp.maximum(h2 + b2_ref[...], 0.0).astype(jnp.bfloat16)
    # Layer 3: h2 @ W3 + b3 (no activation); store bf16 (lane-dense, half the writeback)
    out = jnp.dot(h2, w3_ref[...], preferred_element_type=jnp.float32)
    o_ref[...] = (out + b3_ref[...]).astype(o_ref.dtype)


def prepare_params(params):
    """One-time prep (hoisted out of the per-call path): transpose PyTorch (out,in)
    weights to (in,out), zero-pad the *output* feature dims (H, C) to multiples of 128,
    cast weights to bf16, keep biases in f32 as (1, N) rows. The input feature dim is
    left unpadded (full-dim exemption; it is only a contraction dim)."""
    w1, b1 = params["input_layer"]    # (H, In), (H,)
    w2, b2 = params["hidden_layer"]   # (H, H),  (H,)
    w3, b3 = params["output_layer"]   # (C, H),  (C,)
    In, H, C = w1.shape[1], w1.shape[0], w3.shape[0]
    Hp, Cp = _round_up(H, LANE), _round_up(C, LANE)

    def pad_w(w_t, rows, cols):  # w_t is (in, out)
        return jnp.pad(w_t, ((0, rows - w_t.shape[0]), (0, cols - w_t.shape[1]))
                       ).astype(jnp.bfloat16)

    def pad_b(b, n):
        return jnp.pad(b, (0, n - b.shape[0])).reshape(1, n).astype(jnp.float32)

    return {
        "w1": pad_w(w1.T, In, Hp), "b1": pad_b(b1, Hp),
        "w2": pad_w(w2.T, Hp, Hp), "b2": pad_b(b2, Hp),
        "w3": pad_w(w3.T, Hp, Cp), "b3": pad_b(b3, Cp),
    }


def _choose_batch_tile(b: int, max_tb: int) -> int:
    """b is a multiple of 8. Returns a tile size that is a multiple of 8 (16 when split),
    never exceeds b, minimizes padding waste, and gives >=2 grid steps for b>=64 so the
    'parallel' batch axis can shard across v7x's two TensorCores."""
    if b <= max_tb:
        if b >= 64:
            return _round_up(pl.cdiv(b, 2), 16)
        return b                      # tiny batch: single tile
    n_tiles = pl.cdiv(b, max_tb)
    return min(max_tb, _round_up(pl.cdiv(b, n_tiles), 16))


@functools.partial(jax.jit, static_argnames=("num_classes", "max_block_b"))
def neural_network_forward(x, prepped, *, num_classes, max_block_b=512):
    """x: (B, In) float32.  prepped: output of prepare_params()."""
    B, In = x.shape
    Inw, Hp = prepped["w1"].shape
    Cp = prepped["w3"].shape[1]
    assert Inw == In, "prepared params do not match input feature size"

    # x stays f32 and untouched in HBM.  Only pad trailing batch rows in the rare case
    # B is not sublane-aligned (needed so TB % 8 == 0 satisfies the tiling constraint).
    B_eff = B
    if B % SUBLANE != 0:
        B_eff = _round_up(B, SUBLANE)
        x = jnp.pad(x, ((0, B_eff - B), (0, 0)))

    TB = _choose_batch_tile(B_eff, max_block_b)
    grid = (pl.cdiv(B_eff, TB),)      # partial last tile: OOB rows are masked on store

    # VMEM budget: weights single-buffered (Buffered(1)), activation/output tiles
    # double-buffered, plus headroom for the f32/bf16 intermediates h1/h2.
    weight_bytes = (In * Hp + Hp * Hp + Hp * Cp) * 2 + (2 * Hp + Cp) * 4
    tile_bytes = 2 * TB * In * 4 + 2 * TB * Cp * 2
    live_bytes = 3 * TB * Hp * 4
    needed = weight_bytes + tile_bytes + live_bytes
    vmem_limit = int(min(max(2 * needed, 32 << 20), 64 << 20))  # 64 MiB cap (v7x-safe)

    cost = pl.CostEstimate(
        flops=2 * B_eff * (In * Hp + Hp * Hp + Hp * Cp),
        bytes_accessed=B_eff * In * 4 + B_eff * Cp * 2 + weight_bytes,
        transcendentals=0,
    )

    resident = lambda i: (0, 0)       # weights/biases stay put across the whole grid
    single = pl.Buffered(1)           # grid-invariant -> no double buffering

    out = pl.pallas_call(
        mlp_kernel,
        out_shape=jax.ShapeDtypeStruct((B_eff, Cp), jnp.bfloat16),
        grid=grid,
        in_specs=[
            pl.BlockSpec((TB, In), lambda i: (i, 0)),                    # x tile (f32)
            pl.BlockSpec((In, Hp), resident, pipeline_mode=single),      # W1
            pl.BlockSpec((1, Hp), resident, pipeline_mode=single),       # b1
            pl.BlockSpec((Hp, Hp), resident, pipeline_mode=single),      # W2
            pl.BlockSpec((1, Hp), resident, pipeline_mode=single),       # b2
            pl.BlockSpec((Hp, Cp), resident, pipeline_mode=single),      # W3
            pl.BlockSpec((1, Cp), resident, pipeline_mode=single),       # b3
        ],
        out_specs=pl.BlockSpec((TB, Cp), lambda i: (i, 0)),
        compiler_params=pltpu.CompilerParams(
            dimension_semantics=("parallel",),   # batch axis shards across v7x's 2 TCs
            vmem_limit_bytes=vmem_limit,
        ),
        cost_estimate=cost,
    )(x, prepped["w1"], prepped["b1"], prepped["w2"], prepped["b2"],
      prepped["w3"], prepped["b3"])

    # Slice padded lanes / batch rows off and restore the module's f32 output dtype
    # (tiny (B, C) op, fused by XLA with the slice).
    return out[:B, :num_classes].astype(jnp.float32)


def init_params(key, input_size, hidden_size, num_classes):
    """Deterministic init mimicking nn.Linear's uniform(-1/sqrt(fan_in), 1/sqrt(fan_in))."""
    def linear(k, out_f, in_f):
        kw, kb = jax.random.split(k)
        bound = 1.0 / jnp.sqrt(jnp.float32(in_f))
        w = jax.random.uniform(kw, (out_f, in_f), jnp.float32, -bound, bound)
        b = jax.random.uniform(kb, (out_f,), jnp.float32, -bound, bound)
        return w, b

    k1, k2, k3 = jax.random.split(key, 3)
    return {
        "input_layer": linear(k1, hidden_size, input_size),
        "hidden_layer": linear(k2, hidden_size, hidden_size),
        "output_layer": linear(k3, num_classes, hidden_size),
    }


def reference_forward(x, params):
    w1, b1 = params["input_layer"]
    w2, b2 = params["hidden_layer"]
    w3, b3 = params["output_layer"]
    h = jnp.maximum(x @ w1.T + b1, 0.0)
    h = jnp.maximum(h @ w2.T + b2, 0.0)
    return h @ w3.T + b3


if __name__ == "__main__":
    key = jax.random.PRNGKey(0)
    kx, kp = jax.random.split(key)

    batch, input_size, hidden_size, num_classes = 8, 32, 64, 16
    x = jax.random.normal(kx, (batch, input_size), jnp.float32)
    params = init_params(kp, input_size, hidden_size, num_classes)

    prepped = prepare_params(params)           # one-time weight prep (transpose/pad/bf16)
    out = neural_network_forward(x, prepped, num_classes=num_classes)
    out = jax.block_until_ready(out)

    ref = reference_forward(x, params)         # f32 reference
    assert out.shape == (batch, num_classes)
    # bf16 MXU feeds / bf16 output with f32 accumulation: allow small quantization error.
    assert jnp.allclose(out, ref, atol=5e-2, rtol=5e-2), float(jnp.max(jnp.abs(out - ref)))

    print("KERNEL_OK")
</pallas_src>

<mosaic_0001>
module attributes {stable_mosaic.version = 11 : i64} {
  func.func @mlp_kernel(%arg0: i32, %arg1: memref<8x32xf32, #tpu.memory_space<vmem>>, %arg2: memref<32x128xbf16, #tpu.memory_space<vmem>>, %arg3: memref<1x128xf32, #tpu.memory_space<vmem>>, %arg4: memref<128x128xbf16, #tpu.memory_space<vmem>>, %arg5: memref<1x128xf32, #tpu.memory_space<vmem>>, %arg6: memref<128x128xbf16, #tpu.memory_space<vmem>>, %arg7: memref<1x128xf32, #tpu.memory_space<vmem>>, %arg8: memref<8x128xbf16, #tpu.memory_space<vmem>>) attributes {dimension_semantics = [#tpu.dimension_semantics<parallel>], iteration_bounds = array<i64: 1>, scalar_prefetch = 0 : i64, scratch_operands = 0 : i64, tpu.core_type = #tpu.core_type<tc>, window_params = [{transform_indices = @transform_0, window_bounds = array<i64: 8, 32>}, {pipeline_mode = #tpu.pipeline_mode<synchronous>, transform_indices = @transform_1, window_bounds = array<i64: 32, 128>}, {pipeline_mode = #tpu.pipeline_mode<synchronous>, transform_indices = @transform_2, window_bounds = array<i64: 1, 128>}, {pipeline_mode = #tpu.pipeline_mode<synchronous>, transform_indices = @transform_3, window_bounds = array<i64: 128, 128>}, {pipeline_mode = #tpu.pipeline_mode<synchronous>, transform_indices = @transform_4, window_bounds = array<i64: 1, 128>}, {pipeline_mode = #tpu.pipeline_mode<synchronous>, transform_indices = @transform_5, window_bounds = array<i64: 128, 128>}, {pipeline_mode = #tpu.pipeline_mode<synchronous>, transform_indices = @transform_6, window_bounds = array<i64: 1, 128>}, {transform_indices = @transform_7, window_bounds = array<i64: 8, 128>}]} {
    %c0 = arith.constant 0 : index
    %c0_0 = arith.constant 0 : index
    %0 = vector.load %arg1[%c0, %c0_0] : memref<8x32xf32, #tpu.memory_space<vmem>>, vector<8x32xf32>
    %1 = arith.truncf %0 : vector<8x32xf32> to vector<8x32xbf16>
    %c0_1 = arith.constant 0 : index
    %c0_2 = arith.constant 0 : index
    %2 = vector.load %arg2[%c0_1, %c0_2] : memref<32x128xbf16, #tpu.memory_space<vmem>>, vector<32x128xbf16>
    %cst = arith.constant dense<0.000000e+00> : vector<8x128xf32>
    %3 = tpu.matmul %1, %2, %cst {dimension_numbers = #tpu.dot_dimension_numbers<[1], [0], [0], [1], [0, 0, 1, 1], [], []>} : vector<8x32xbf16>, vector<32x128xbf16>, vector<8x128xf32> -> vector<8x128xf32>
    %c0_3 = arith.constant 0 : index
    %c0_4 = arith.constant 0 : index
    %4 = vector.load %arg3[%c0_3, %c0_4] : memref<1x128xf32, #tpu.memory_space<vmem>>, vector<1x128xf32>
    %5 = vector.broadcast %4 : vector<1x128xf32> to vector<8x128xf32>
    %6 = arith.addf %3, %5 : vector<8x128xf32>
    %cst_5 = arith.constant 0.000000e+00 : f32
    %7 = vector.broadcast %cst_5 : f32 to vector<8x128xf32>
    %8 = arith.maximumf %6, %7 : vector<8x128xf32>
    %9 = arith.truncf %8 : vector<8x128xf32> to vector<8x128xbf16>
    %c0_6 = arith.constant 0 : index
    %c0_7 = arith.constant 0 : index
    %10 = vector.load %arg4[%c0_6, %c0_7] : memref<128x128xbf16, #tpu.memory_space<vmem>>, vector<128x128xbf16>
    %cst_8 = arith.constant dense<0.000000e+00> : vector<8x128xf32>
    %11 = tpu.matmul %9, %10, %cst_8 {dimension_numbers = #tpu.dot_dimension_numbers<[1], [0], [0], [1], [0, 0, 1, 1], [], []>} : vector<8x128xbf16>, vector<128x128xbf16>, vector<8x128xf32> -> vector<8x128xf32>
    %c0_9 = arith.constant 0 : index
    %c0_10 = arith.constant 0 : index
    %12 = vector.load %arg5[%c0_9, %c0_10] : memref<1x128xf32, #tpu.memory_space<vmem>>, vector<1x128xf32>
    %13 = vector.broadcast %12 : vector<1x128xf32> to vector<8x128xf32>
    %14 = arith.addf %11, %13 : vector<8x128xf32>
    %cst_11 = arith.constant 0.000000e+00 : f32
    %15 = vector.broadcast %cst_11 : f32 to vector<8x128xf32>
    %16 = arith.maximumf %14, %15 : vector<8x128xf32>
    %17 = arith.truncf %16 : vector<8x128xf32> to vector<8x128xbf16>
    %c0_12 = arith.constant 0 : index
    %c0_13 = arith.constant 0 : index
    %18 = vector.load %arg6[%c0_12, %c0_13] : memref<128x128xbf16, #tpu.memory_space<vmem>>, vector<128x128xbf16>
    %cst_14 = arith.constant dense<0.000000e+00> : vector<8x128xf32>
    %19 = tpu.matmul %17, %18, %cst_14 {dimension_numbers = #tpu.dot_dimension_numbers<[1], [0], [0], [1], [0, 0, 1, 1], [], []>} : vector<8x128xbf16>, vector<128x128xbf16>, vector<8x128xf32> -> vector<8x128xf32>
    %c0_15 = arith.constant 0 : index
    %c0_16 = arith.constant 0 : index
    %20 = vector.load %arg7[%c0_15, %c0_16] : memref<1x128xf32, #tpu.memory_space<vmem>>, vector<1x128xf32>
    %21 = vector.broadcast %20 : vector<1x128xf32> to vector<8x128xf32>
    %22 = arith.addf %19, %21 : vector<8x128xf32>
    %23 = arith.truncf %22 : vector<8x128xf32> to vector<8x128xbf16>
    %c0_17 = arith.constant 0 : index
    %c0_18 = arith.constant 0 : index
    %24 = vector.load %arg8[%c0_17, %c0_18] : memref<8x128xbf16, #tpu.memory_space<vmem>>, vector<8x128xbf16>
    tpu.vector_store %arg8[%c0_17, %c0_18], %23 {strides = array<i32>} : memref<8x128xbf16, #tpu.memory_space<vmem>>, vector<8x128xbf16>,
    return
  }
  func.func @transform_0(%arg0: i32) -> (i32, i32) {
    %c0_i32 = arith.constant 0 : i32
    %c0_i32_0 = arith.constant 0 : i32
    return %arg0, %c0_i32 : i32, i32
  }
  func.func @transform_1(%arg0: i32) -> (i32, i32) {
    %c0_i32 = arith.constant 0 : i32
    %c0_i32_0 = arith.constant 0 : i32
    %c0_i32_1 = arith.constant 0 : i32
    return %c0_i32, %c0_i32_0 : i32, i32
  }
  func.func @transform_2(%arg0: i32) -> (i32, i32) {
    %c0_i32 = arith.constant 0 : i32
    %c0_i32_0 = arith.constant 0 : i32
    %c0_i32_1 = arith.constant 0 : i32
    return %c0_i32, %c0_i32_0 : i32, i32
  }
  func.func @transform_3(%arg0: i32) -> (i32, i32) {
    %c0_i32 = arith.constant 0 : i32
    %c0_i32_0 = arith.constant 0 : i32
    %c0_i32_1 = arith.constant 0 : i32
    return %c0_i32, %c0_i32_0 : i32, i32
  }
  func.func @transform_4(%arg0: i32) -> (i32, i32) {
    %c0_i32 = arith.constant 0 : i32
    %c0_i32_0 = arith.constant 0 : i32
    %c0_i32_1 = arith.constant 0 : i32
    return %c0_i32, %c0_i32_0 : i32, i32
  }
  func.func @transform_5(%arg0: i32) -> (i32, i32) {
    %c0_i32 = arith.constant 0 : i32
    %c0_i32_0 = arith.constant 0 : i32
    %c0_i32_1 = arith.constant 0 : i32
    return %c0_i32, %c0_i32_0 : i32, i32
  }
  func.func @transform_6(%arg0: i32) -> (i32, i32) {
    %c0_i32 = arith.constant 0 : i32
    %c0_i32_0 = arith.constant 0 : i32
    %c0_i32_1 = arith.constant 0 : i32
    return %c0_i32, %c0_i32_0 : i32, i32
  }
  func.func @transform_7(%arg0: i32) -> (i32, i32) {
    %c0_i32 = arith.constant 0 : i32
    %c0_i32_0 = arith.constant 0 : i32
    return %arg0, %c0_i32 : i32, i32
  }
}

</mosaic_0001>

<llo_original>
// kernel: neural_network_forward.1
$region0: #{neural_network_forward.1}
  #allocation0 [shape = 'u32[]', space=smem, size = 0x4, offset = 0x4, fixed_abs, tag = 'smem constant byte address 0x4 - core index']
  #allocation1 [shape = 'u32[144,128]{1,0:T(1,128)}', space=vmem, size = 0x12000, scoped, tag = 'internal scratch']
  %s0 = inlined_call_operand.hbm [shape: f32[8,32], index: 0, kind: input, shape index: {}]
  %s1 = inlined_call_operand.hbm [shape: bf16[32,128], index: 1, kind: input, shape index: {}]
  %s2 = inlined_call_operand.vmem [shape: f32[1,128], index: 2, kind: input, shape index: {}]
  %s3 = inlined_call_operand.hbm [shape: bf16[128,128], index: 3, kind: input, shape index: {}]
  %s4 = inlined_call_operand.vmem [shape: f32[1,128], index: 4, kind: input, shape index: {}]
  %s5 = inlined_call_operand.hbm [shape: bf16[128,128], index: 5, kind: input, shape index: {}]
  %s6 = inlined_call_operand.vmem [shape: f32[1,128], index: 6, kind: input, shape index: {}]
  %s7 = inlined_call_operand.vmem [shape: bf16[8,128], index: 7, kind: output, shape index: {}]
  %s8 = sld [smem:[#allocation0]]
  $region54: #{neural_network_forward.1} parent=0
    _
  %s10 = ssub.s32 1, %s8
  %s11 = scalar_select 0, %s10, %s8
  $region1: #{neural_network_forward.1} parent=0
    #allocation2 [shape = 'u8[4096]{0}', space=vmem, size = 0x1000, scoped, tag = 'input window, operand 0, single buffered']
    #allocation3 [shape = 's32[1]{0}', space=sflag, size = 0x4, scoped, tag = 'scoped memory for neural_network_forward.1']
    #allocation4 [shape = 'u8[8192]{0}', space=vmem, size = 0x2000, scoped, tag = 'input window, operand 1, single buffered']
    #allocation5 [shape = 's32[1]{0}', space=sflag, size = 0x4, scoped, tag = 'scoped memory for neural_network_forward.1']
    #allocation6 [shape = 'u8[32768]{0}', space=vmem, size = 0x8000, scoped, tag = 'input window, operand 3, single buffered']
    #allocation7 [shape = 'u8[32768]{0}', space=vmem, size = 0x8000, scoped, tag = 'input window, operand 5, single buffered']
    #allocation8 [shape = 's32[1]{0}', space=sflag, size = 0x4, scoped, tag = 'scoped memory for neural_network_forward.1']
    %12 = vsyncpa [#allocation3], 0
    %13 = vsyncpa [#allocation5], 0
    %14 = vsyncpa [#allocation8], 0
    // Predicated region
    $region2: #{neural_network_forward.1} parent=1 // pred_check
      _
    $region3: #{neural_network_forward.1} parent=1 // pred_check_branch
      %16 = sbr.rel (0) target = $region5
    $region4: #{neural_network_forward.1} parent=1 // pred_region
      %s18 = ssub.s32 128, 128
      %19 = vsyncadd [#allocation3], %s18
      %s21 = sshll.u32 [#allocation2], 4
      %s22 = int_to_ptr.vmem [resolvable:$true] %s21
      %24 = dma.hbm_to_vmem [thread:$0]  %s0, 128, %s22, [#allocation3]
    $region5: #{neural_network_forward.1} parent=1 // pred_fallthru
      _
    // Predicated region
    $region6: #{neural_network_forward.1} parent=1 // pred_check
      _
    $region7: #{neural_network_forward.1} parent=1 // pred_check_branch
      %26 = sbr.rel (0) target = $region9
    $region8: #{neural_network_forward.1} parent=1 // pred_region
      %s28 = ssub.s32 256, 256
      %29 = vsyncadd [#allocation5], %s28
      %s30 = sshll.u32 [#allocation4], 4
      %s31 = int_to_ptr.vmem [resolvable:$true] %s30
      %36 = dma.hbm_to_vmem [thread:$0]  %s1, 256, %s31, [#allocation5], 64, 64, 4
    $region9: #{neural_network_forward.1} parent=1 // pred_fallthru
      _
    // Predicated region
    $region10: #{neural_network_forward.1} parent=1 // pred_check
      _
    $region11: #{neural_network_forward.1} parent=1 // pred_check_branch
      %38 = sbr.rel (0) target = $region13
    $region12: #{neural_network_forward.1} parent=1 // pred_region
      _
    $region13: #{neural_network_forward.1} parent=1 // pred_fallthru
      _
    // Predicated region
    $region14: #{neural_network_forward.1} parent=1 // pred_check
      _
    $region15: #{neural_network_forward.1} parent=1 // pred_check_branch
      %40 = sbr.rel (0) target = $region17
    $region16: #{neural_network_forward.1} parent=1 // pred_region
      %s42 = ssub.s32 1024, 1024
      %43 = vsyncadd [#allocation5], %s42
      %s44 = sshll.u32 [#allocation6], 4
      %s45 = int_to_ptr.vmem [resolvable:$true] %s44
      %50 = dma.hbm_to_vmem [thread:$0]  %s3, 1024, %s45, [#allocation5], 64, 64, 4
    $region17: #{neural_network_forward.1} parent=1 // pred_fallthru
      _
    // Predicated region
    $region18: #{neural_network_forward.1} parent=1 // pred_check
      _
    $region19: #{neural_network_forward.1} parent=1 // pred_check_branch
      %52 = sbr.rel (0) target = $region21
    $region20: #{neural_network_forward.1} parent=1 // pred_region
      _
    $region21: #{neural_network_forward.1} parent=1 // pred_fallthru
      _
    // Predicated region
    $region22: #{neural_network_forward.1} parent=1 // pred_check
      _
    $region23: #{neural_network_forward.1} parent=1 // pred_check_branch
      %54 = sbr.rel (0) target = $region25
    $region24: #{neural_network_forward.1} parent=1 // pred_region
      %s56 = ssub.s32 1024, 1024
      %57 = vsyncadd [#allocation8], %s56
      %s58 = sshll.u32 [#allocation7], 4
      %s59 = int_to_ptr.vmem [resolvable:$true] %s58
      %64 = dma.hbm_to_vmem [thread:$0]  %s5, 1024, %s59, [#allocation8], 64, 64, 4
    $region25: #{neural_network_forward.1} parent=1 // pred_fallthru
      _
    // Predicated region
    $region26: #{neural_network_forward.1} parent=1 // pred_check
      _
    $region27: #{neural_network_forward.1} parent=1 // pred_check_branch
      %66 = sbr.rel (0) target = $region29
    $region28: #{neural_network_forward.1} parent=1 // pred_region
      _
    $region29: #{neural_network_forward.1} parent=1 // pred_fallthru
      _
    // Predicated region
    $region30: #{neural_network_forward.1} parent=1 // pred_check
      _
    $region31: #{neural_network_forward.1} parent=1 // pred_check_branch
      %68 = sbr.rel (0) target = $region33
    $region32: #{neural_network_forward.1} parent=1 // pred_region
      %69 = dma.done [#allocation3], 128
    $region33: #{neural_network_forward.1} parent=1 // pred_fallthru
      _
    // Predicated region
    $region34: #{neural_network_forward.1} parent=1 // pred_check
      _
    $region35: #{neural_network_forward.1} parent=1 // pred_check_branch
      %71 = sbr.rel (0) target = $region37
    $region36: #{neural_network_forward.1} parent=1 // pred_region
      %72 = dma.done [#allocation5], 256
    $region37: #{neural_network_forward.1} parent=1 // pred_fallthru
      _
    // Predicated region
    $region38: #{neural_network_forward.1} parent=1 // pred_check
      _
    $region39: #{neural_network_forward.1} parent=1 // pred_check_branch
      %74 = sbr.rel (0) target = $region41
    $region40: #{neural_network_forward.1} parent=1 // pred_region
      %75 = dma.done [#allocation5], 1024
    $region41: #{neural_network_forward.1} parent=1 // pred_fallthru
      _
    // Predicated region
    $region42: #{neural_network_forward.1} parent=1 // pred_check
      _
    $region43: #{neural_network_forward.1} parent=1 // pred_check_branch
      %77 = sbr.rel (0) target = $region45
    $region44: #{neural_network_forward.1} parent=1 // pred_region
      %78 = dma.done [#allocation8], 1024
    $region45: #{neural_network_forward.1} parent=1 // pred_fallthru
      _
    %v80 = vld [vmem:[#allocation2] sm:$0xff]
    %v81 = vpack.c.bf16 %v80, %v80
    %v82 = vld [vmem:[#allocation4] sm:$0xf]
    %v83 = vld [vmem:[#allocation4 + $0x4] sm:$0xf]
    %v84 = vld [vmem:[#allocation4 + $0x8] sm:$0xf]
    %v85 = vld [vmem:[#allocation4 + $0xc] sm:$0xf]
    %v86 = vld [vmem:[%s2] sm:$0x1]
    %v88 = vlaneseq
    %v89 = vshrl.u32 %v88, 7
    %v90 = vsub.s32 0, %v89
    %v91 = vrot.slane %v86, %v90
    %v97 = vunpack.c.l.b16 %v82
    %v98 = vunpack.c.l.b16 %v83
    %v99 = vunpack.c.l.b16 %v84
    %v100 = vunpack.c.l.b16 %v85
    %v101 = vpack.c.b16 %v98, %v97
    %v102 = vpack.c.b16 %v100, %v99
    %vm105 = vcmask 261120
    %v107 = vsel %vm105, %v81, 0
    %109 = vmatprep.subr.bf16.mxu0 0
    %110 = vmatpush1.bf16.msra.mxu0 0
    %111 = vmatprep.subr.bf16.mxu0 0
    %112 = vmatpush1.bf16.msra.mxu0 0
    %113 = vmatprep.subr.bf16.mxu0 0
    %114 = vmatpush1.bf16.msra.mxu0 0
    %115 = vmatprep.subr.bf16.mxu0 0
    %116 = vmatpush1.bf16.msra.mxu0 0
    %117 = vmatprep.subr.bf16.mxu0 0
    %118 = vmatpush1.bf16.msra.mxu0 0
    %119 = vmatprep.subr.bf16.mxu0 0
    %120 = vmatpush1.bf16.msra.mxu0 0
    %121 = vmatprep.subr.bf16.mxu0 0
    %122 = vmatpush1.bf16.msra.mxu0 %v102
    %123 = vmatprep.subr.bf16.mxu0 0
    %124 = vmatpush1.bf16.msra.mxu0 %v101
    %125 = vmatprep.subr.bf16.mxu0 0
    %126 = vmatpush2.bf16.msra.mxu0 0
    %127 = vmatprep.subr.bf16.mxu0 0
    %128 = vmatpush2.bf16.msra.mxu0 0
    %129 = vmatprep.subr.bf16.mxu0 0
    %130 = vmatpush2.bf16.msra.mxu0 0
    %131 = vmatprep.subr.bf16.mxu0 0
    %132 = vmatpush2.bf16.msra.mxu0 0
    %133 = vmatprep.subr.bf16.mxu0 0
    %134 = vmatpush2.bf16.msra.mxu0 0
    %135 = vmatprep.subr.bf16.mxu0 0
    %136 = vmatpush2.bf16.msra.mxu0 0
    %137 = vmatprep.subr.bf16.mxu0 0
    %138 = vmatpush2.bf16.msra.mxu0 0
    %139 = vmatprep.subr.bf16.mxu0 0
    %140 = vmatpush2.bf16.msra.mxu0 0
    %141 = vmatprep.mubr.bf16.mxu0 0
    %142 = vmatmul.mubr.bf16.gmra.mxu0 %v107
    %v143 = vpop.f32.mrf.mxu0
    %v144 = vadd.f32 %v91, %v143
    %v145 = vpop.f32.mrf.mxu0
    %v146 = vpop.f32.mrf.mxu0
    %v147 = vpop.f32.mrf.mxu0
    %148 = vdwg.mxu0
    %v149 = vmax.f32 %v144, 0.0
    %v150 = vpack.c.bf16 %v149, %v149
    %v151 = vld [vmem:[#allocation6] sm:$0xf]
    %v152 = vld [vmem:[#allocation6 + $0x4] sm:$0xf]
    %v153 = vld [vmem:[#allocation6 + $0x8] sm:$0xf]
    %v154 = vld [vmem:[#allocation6 + $0xc] sm:$0xf]
    %v155 = vld [vmem:[#allocation6 + $0x10] sm:$0xf]
    %v156 = vld [vmem:[#allocation6 + $0x14] sm:$0xf]
    %v157 = vld [vmem:[#allocation6 + $0x18] sm:$0xf]
    %v158 = vld [vmem:[#allocation6 + $0x1c] sm:$0xf]
    %v159 = vld [vmem:[#allocation6 + $0x20] sm:$0xf]
    %v160 = vld [vmem:[#allocation6 + $0x24] sm:$0xf]
    %v161 = vld [vmem:[#allocation6 + $0x28] sm:$0xf]
    %v162 = vld [vmem:[#allocation6 + $0x2c] sm:$0xf]
    %v163 = vld [vmem:[#allocation6 + $0x30] sm:$0xf]
    %v164 = vld [vmem:[#allocation6 + $0x34] sm:$0xf]
    %v165 = vld [vmem:[#allocation6 + $0x38] sm:$0xf]
    %v166 = vld [vmem:[#allocation6 + $0x3c] sm:$0xf]
    %v167 = vld [vmem:[%s4] sm:$0x1]
    %v169 = vlaneseq
    %v170 = vshrl.u32 %v169, 7
    %v171 = vsub.s32 0, %v170
    %v172 = vrot.slane %v167, %v171
    %v190 = vunpack.c.l.b16 %v151
    %v191 = vunpack.c.l.b16 %v152
    %v192 = vunpack.c.l.b16 %v153
    %v193 = vunpack.c.l.b16 %v154
    %v194 = vunpack.c.l.b16 %v155
    %v195 = vunpack.c.l.b16 %v156
    %v196 = vunpack.c.l.b16 %v157
    %v197 = vunpack.c.l.b16 %v158
    %v198 = vunpack.c.l.b16 %v159
    %v199 = vunpack.c.l.b16 %v160
    %v200 = vunpack.c.l.b16 %v161
    %v201 = vunpack.c.l.b16 %v162
    %v202 = vunpack.c.l.b16 %v163
    %v203 = vunpack.c.l.b16 %v164
    %v204 = vunpack.c.l.b16 %v165
    %v205 = vunpack.c.l.b16 %v166
    %v206 = vpack.c.b16 %v191, %v190
    %v207 = vpack.c.b16 %v193, %v192
    %v208 = vpack.c.b16 %v195, %v194
    %v209 = vpack.c.b16 %v197, %v196
    %v210 = vpack.c.b16 %v199, %v198
    %v211 = vpack.c.b16 %v201, %v200
    %v212 = vpack.c.b16 %v203, %v202
    %v213 = vpack.c.b16 %v205, %v204
    %222 = vmatprep.subr.bf16.mxu0 0
    %223 = vmatpush1.bf16.msra.mxu0 %v213
    %224 = vmatprep.subr.bf16.mxu0 0
    %225 = vmatpush1.bf16.msra.mxu0 %v212
    %226 = vmatprep.subr.bf16.mxu0 0
    %227 = vmatpush1.bf16.msra.mxu0 %v211
    %228 = vmatprep.subr.bf16.mxu0 0
    %229 = vmatpush1.bf16.msra.mxu0 %v210
    %230 = vmatprep.subr.bf16.mxu0 0
    %231 = vmatpush1.bf16.msra.mxu0 %v209
    %232 = vmatprep.subr.bf16.mxu0 0
    %233 = vmatpush1.bf16.msra.mxu0 %v208
    %234 = vmatprep.subr.bf16.mxu0 0
    %235 = vmatpush1.bf16.msra.mxu0 %v207
    %236 = vmatprep.subr.bf16.mxu0 0
    %237 = vmatpush1.bf16.msra.mxu0 %v206
    %238 = vmatprep.subr.bf16.mxu0 0
    %239 = vmatpush2.bf16.msra.mxu0 0
    %240 = vmatprep.subr.bf16.mxu0 0
    %241 = vmatpush2.bf16.msra.mxu0 0
    %242 = vmatprep.subr.bf16.mxu0 0
    %243 = vmatpush2.bf16.msra.mxu0 0
    %244 = vmatprep.subr.bf16.mxu0 0
    %245 = vmatpush2.bf16.msra.mxu0 0
    %246 = vmatprep.subr.bf16.mxu0 0
    %247 = vmatpush2.bf16.msra.mxu0 0
    %248 = vmatprep.subr.bf16.mxu0 0
    %249 = vmatpush2.bf16.msra.mxu0 0
    %250 = vmatprep.subr.bf16.mxu0 0
    %251 = vmatpush2.bf16.msra.mxu0 0
    %252 = vmatprep.subr.bf16.mxu0 0
    %253 = vmatpush2.bf16.msra.mxu0 0
    %254 = vmatprep.mubr.bf16.mxu0 0
    %255 = vmatmul.mubr.bf16.gmra.mxu0 %v150
    %v256 = vpop.f32.mrf.mxu0
    %v257 = vadd.f32 %v172, %v256
    %v258 = vpop.f32.mrf.mxu0
    %v259 = vpop.f32.mrf.mxu0
    %v260 = vpop.f32.mrf.mxu0
    %261 = vdwg.mxu0
    %v262 = vmax.f32 %v257, 0.0
    %v263 = vpack.c.bf16 %v262, %v262
    %v264 = vld [vmem:[#allocation7] sm:$0xf]
    %v265 = vld [vmem:[#allocation7 + $0x4] sm:$0xf]
    %v266 = vld [vmem:[#allocation7 + $0x8] sm:$0xf]
    %v267 = vld [vmem:[#allocation7 + $0xc] sm:$0xf]
    %v268 = vld [vmem:[#allocation7 + $0x10] sm:$0xf]
    %v269 = vld [vmem:[#allocation7 + $0x14] sm:$0xf]
    %v270 = vld [vmem:[#allocation7 + $0x18] sm:$0xf]
    %v271 = vld [vmem:[#allocation7 + $0x1c] sm:$0xf]
    %v272 = vld [vmem:[#allocation7 + $0x20] sm:$0xf]
    %v273 = vld [vmem:[#allocation7 + $0x24] sm:$0xf]
    %v274 = vld [vmem:[#allocation7 + $0x28] sm:$0xf]
    %v275 = vld [vmem:[#allocation7 + $0x2c] sm:$0xf]
    %v276 = vld [vmem:[#allocation7 + $0x30] sm:$0xf]
    %v277 = vld [vmem:[#allocation7 + $0x34] sm:$0xf]
    %v278 = vld [vmem:[#allocation7 + $0x38] sm:$0xf]
    %v279 = vld [vmem:[#allocation7 + $0x3c] sm:$0xf]
    %v280 = vld [vmem:[%s6] sm:$0x1]
    %v282 = vlaneseq
    %v283 = vshrl.u32 %v282, 7
    %v284 = vsub.s32 0, %v283
    %v285 = vrot.slane %v280, %v284
    %v303 = vunpack.c.l.b16 %v264
    %v304 = vunpack.c.l.b16 %v265
    %v305 = vunpack.c.l.b16 %v266
    %v306 = vunpack.c.l.b16 %v267
    %v307 = vunpack.c.l.b16 %v268
    %v308 = vunpack.c.l.b16 %v269
    %v309 = vunpack.c.l.b16 %v270
    %v310 = vunpack.c.l.b16 %v271
    %v311 = vunpack.c.l.b16 %v272
    %v312 = vunpack.c.l.b16 %v273
    %v313 = vunpack.c.l.b16 %v274
    %v314 = vunpack.c.l.b16 %v275
    %v315 = vunpack.c.l.b16 %v276
    %v316 = vunpack.c.l.b16 %v277
    %v317 = vunpack.c.l.b16 %v278
    %v318 = vunpack.c.l.b16 %v279
    %v319 = vpack.c.b16 %v304, %v303
    %v320 = vpack.c.b16 %v306, %v305
    %v321 = vpack.c.b16 %v308, %v307
    %v322 = vpack.c.b16 %v310, %v309
    %v323 = vpack.c.b16 %v312, %v311
    %v324 = vpack.c.b16 %v314, %v313
    %v325 = vpack.c.b16 %v316, %v315
    %v326 = vpack.c.b16 %v318, %v317
    %335 = vmatprep.subr.bf16.mxu0 0
    %336 = vmatpush1.bf16.msra.mxu0 %v326
    %337 = vmatprep.subr.bf16.mxu0 0
    %338 = vmatpush1.bf16.msra.mxu0 %v325
    %339 = vmatprep.subr.bf16.mxu0 0
    %340 = vmatpush1.bf16.msra.mxu0 %v324
    %341 = vmatprep.subr.bf16.mxu0 0
    %342 = vmatpush1.bf16.msra.mxu0 %v323
    %343 = vmatprep.subr.bf16.mxu0 0
    %344 = vmatpush1.bf16.msra.mxu0 %v322
    %345 = vmatprep.subr.bf16.mxu0 0
    %346 = vmatpush1.bf16.msra.mxu0 %v321
    %347 = vmatprep.subr.bf16.mxu0 0
    %348 = vmatpush1.bf16.msra.mxu0 %v320
    %349 = vmatprep.subr.bf16.mxu0 0
    %350 = vmatpush1.bf16.msra.mxu0 %v319
    %351 = vmatprep.subr.bf16.mxu0 0
    %352 = vmatpush2.bf16.msra.mxu0 0
    %353 = vmatprep.subr.bf16.mxu0 0
    %354 = vmatpush2.bf16.msra.mxu0 0
    %355 = vmatprep.subr.bf16.mxu0 0
    %356 = vmatpush2.bf16.msra.mxu0 0
    %357 = vmatprep.subr.bf16.mxu0 0
    %358 = vmatpush2.bf16.msra.mxu0 0
    %359 = vmatprep.subr.bf16.mxu0 0
    %360 = vmatpush2.bf16.msra.mxu0 0
    %361 = vmatprep.subr.bf16.mxu0 0
    %362 = vmatpush2.bf16.msra.mxu0 0
    %363 = vmatprep.subr.bf16.mxu0 0
    %364 = vmatpush2.bf16.msra.mxu0 0
    %365 = vmatprep.subr.bf16.mxu0 0
    %366 = vmatpush2.bf16.msra.mxu0 0
    %367 = vmatprep.mubr.bf16.mxu0 0
    %368 = vmatmul.mubr.bf16.gmra.mxu0 %v263
    %v369 = vpop.f32.mrf.mxu0
    %v370 = vadd.f32 %v285, %v369
    %v371 = vpop.f32.mrf.mxu0
    %v372 = vpop.f32.mrf.mxu0
    %v373 = vpop.f32.mrf.mxu0
    %374 = vdwg.mxu0
    %v375 = vpack.c.bf16 %v370, %v370
    %376 = vst [vmem:[%s7] sm:$0xf] %v375
    // Predicated region
    $region46: #{neural_network_forward.1} parent=1 // pred_check
      _
    $region47: #{neural_network_forward.1} parent=1 // pred_check_branch
      %378 = sbr.rel (0) target = $region49
    $region48: #{neural_network_forward.1} parent=1 // pred_region
      _
    $region49: #{neural_network_forward.1} parent=1 // pred_fallthru
      _
    // Predicated region
    $region50: #{neural_network_forward.1} parent=1 // pred_check
      _
    $region51: #{neural_network_forward.1} parent=1 // pred_check_branch
      %380 = sbr.rel (0) target = $region53
    $region52: #{neural_network_forward.1} parent=1 // pred_region
      _
    $region53: #{neural_network_forward.1} parent=1 // pred_fallthru
      _
    %381 = vsyncpa [#allocation3], 1
    %382 = vsyncpa [#allocation5], 1
    %383 = vsyncpa [#allocation8], 1

</llo_original>
